<compile_context>
chip_gen: v5e
topology: v5e:2x2
jax: 0.10.0
libtpu: 0.0.40
codegen_flags: <defaults>
</compile_context>

<pallas_src>
import jax
import jax.numpy as jnp
from jax.experimental import pallas as pl
from jax.experimental.pallas import tpu as pltpu

SUBLANE = 8            # f32 sublane granularity for batch-tile sizing
MAX_BATCH_TILE = 2048  # rows per grid step (tb * (16+8) * 4 B * 2 bufs < 0.5 MiB)


def _round_up(x, m):
    return ((x + m - 1) // m) * m


def _mlp_kernel(x_ref, w1_ref, b1_ref, w2_ref, b2_ref, out_ref):
    # x_ref:   (TB, D_IN)    f32   (streams through VMEM, double-buffered)
    # w1_ref:  (D_IN, H)     f32   b1_ref: (1, H)      f32   (VMEM-resident)
    # w2_ref:  (H, DOUT_P)   f32   b2_ref: (1, DOUT_P) f32   (VMEM-resident)
    # out_ref: (TB, DOUT_P)  f32
    h = jnp.dot(x_ref[...], w1_ref[...], preferred_element_type=jnp.float32)
    h = jnp.maximum(h + b1_ref[...], 0.0)                       # bias + ReLU
    z = jnp.dot(h, w2_ref[...], preferred_element_type=jnp.float32)
    out_ref[...] = jax.nn.sigmoid(z + b2_ref[...])


def prepare_params(w1, b1, w2, b2):
    """One-time packing: only the output dim is padded (to 8 lanes).

    Zero padding is numerically exact: padded output columns carry weight 0 and
    bias 0 -> sigmoid(0)=0.5, which is sliced off before returning.
    """
    d_in, hid = w1.shape
    hid2, d_out = w2.shape
    assert hid == hid2
    dout_p = _round_up(d_out, SUBLANE)

    w1p = w1.astype(jnp.float32)                                   # (d_in, hid)
    b1p = b1.astype(jnp.float32).reshape(1, hid)                   # (1, hid)
    w2p = jnp.zeros((hid, dout_p), jnp.float32).at[:, :d_out].set(
        w2.astype(jnp.float32))                                    # (hid, dout_p)
    b2p = jnp.zeros((1, dout_p), jnp.float32).at[0, :d_out].set(
        b2.astype(jnp.float32))                                    # (1, dout_p)
    return (w1p, b1p, w2p, b2p), (d_in, hid, d_out)


def simple_classifier_forward(x, packed_params, logical_dims, *,
                              max_tile=MAX_BATCH_TILE):
    """Pallas forward pass. x: (B, d_in) f32 -> (B, d_out) f32."""
    w1p, b1p, w2p, b2p = packed_params
    d_in, hid, d_out = logical_dims
    assert x.shape[1] == d_in
    B = x.shape[0]
    x = x.astype(jnp.float32)

    # Only very small batches get a tiny pad so block_shape never exceeds the
    # array; everything else is passed through untouched (no HBM copy).
    if B < SUBLANE:
        x = jnp.pad(x, ((0, SUBLANE - B), (0, 0)))
    bk = x.shape[0]
    dout_p = w2p.shape[1]

    # Batch tile: at least 2 grid steps when B allows it (v7x dual TensorCore),
    # capped at max_tile; grid handles a ragged last tile (no batch round-up).
    half = _round_up(pl.cdiv(bk, 2), SUBLANE)
    tb = max(SUBLANE, min(max_tile, half))
    grid = (pl.cdiv(bk, tb),)

    flops = 2 * B * (d_in * hid + hid * d_out)
    bytes_accessed = (x.size * 4 + (w1p.size + b1p.size + w2p.size + b2p.size) * 4
                      + bk * dout_p * 4)
    cost = pl.CostEstimate(flops=flops,
                           transcendentals=B * d_out,
                           bytes_accessed=bytes_accessed)

    out = pl.pallas_call(
        _mlp_kernel,
        out_shape=jax.ShapeDtypeStruct((bk, dout_p), jnp.float32),
        grid_spec=pl.GridSpec(
            grid=grid,
            in_specs=[
                pl.BlockSpec((tb, d_in), lambda i: (i, 0)),     # x streams
                pl.BlockSpec((d_in, hid), lambda i: (0, 0)),    # weights/biases
                pl.BlockSpec((1, hid), lambda i: (0, 0)),       # stay resident
                pl.BlockSpec((hid, dout_p), lambda i: (0, 0)),  # in VMEM across
                pl.BlockSpec((1, dout_p), lambda i: (0, 0)),    # the batch loop
            ],
            out_specs=pl.BlockSpec((tb, dout_p), lambda i: (i, 0)),
        ),
        compiler_params=pltpu.CompilerParams(
            # Independent batch rows -> megacore sharding on v7x.
            # No vmem_limit override: footprint < 0.5 MiB, default scoped VMEM
            # is ample on v5e/v6e (128 MiB) and v7x (64 MiB).
            dimension_semantics=("parallel",),
        ),
        cost_estimate=cost,
    )(x, w1p, b1p, w2p, b2p)

    return out[:B, :d_out]


# ---------------------------------------------------------------------------
# Init + reference (PyTorch semantics)
# ---------------------------------------------------------------------------
def xavier_uniform(key, fan_in, fan_out, dtype=jnp.float32):
    # torch.nn.init.xavier_uniform_ (gain=1.0); stored pre-transposed (in, out).
    limit = jnp.sqrt(6.0 / (fan_in + fan_out))
    return jax.random.uniform(key, (fan_in, fan_out), dtype=dtype,
                              minval=-limit, maxval=limit)


def init_params(key, input_size, output_size, hidden_units=32):
    k1, k2 = jax.random.split(key)
    w1 = xavier_uniform(k1, input_size, hidden_units)
    b1 = jnp.full((hidden_units,), 0.01, dtype=jnp.float32)
    w2 = xavier_uniform(k2, hidden_units, output_size)
    b2 = jnp.full((output_size,), 0.01, dtype=jnp.float32)
    return w1, b1, w2, b2


def reference_forward_f32(x, w1, b1, w2, b2):
    h = jnp.maximum(x @ w1 + b1, 0.0)
    return jax.nn.sigmoid(h @ w2 + b2)


if __name__ == "__main__":
    key = jax.random.PRNGKey(0)
    kx, kp, kx2 = jax.random.split(key, 3)

    batch = 8
    input_size = 16
    hidden_units = 32
    output_size = 4

    w1, b1, w2, b2 = init_params(kp, input_size, output_size, hidden_units)
    packed, dims = prepare_params(w1, b1, w2, b2)

    # --- small batch (single grid step) ---
    x = jax.random.normal(kx, (batch, input_size), dtype=jnp.float32)
    out = jax.block_until_ready(simple_classifier_forward(x, packed, dims))
    assert out.shape == (batch, output_size)
    ref = reference_forward_f32(x, w1, b1, w2, b2)
    assert jnp.allclose(out, ref, atol=2e-2, rtol=2e-2), "mismatch (small batch)"

    # --- larger batch: multi-step grid + ragged last tile (300 % 128 != 0) ---
    x2 = jax.random.normal(kx2, (300, input_size), dtype=jnp.float32)
    out2 = jax.block_until_ready(
        simple_classifier_forward(x2, packed, dims, max_tile=128))
    assert out2.shape == (300, output_size)
    ref2 = reference_forward_f32(x2, w1, b1, w2, b2)
    assert jnp.allclose(out2, ref2, atol=2e-2, rtol=2e-2), "mismatch (tiled batch)"

    # --- default tiling path (two grid steps at B=300: tb = 152) ---
    out3 = jax.block_until_ready(simple_classifier_forward(x2, packed, dims))
    assert out3.shape == (300, output_size)
    assert jnp.allclose(out3, ref2, atol=2e-2, rtol=2e-2), "mismatch (default tile)"

    print("KERNEL_OK")
</pallas_src>

<mosaic_0001>
module attributes {stable_mosaic.version = 11 : i64} {
  func.func @_mlp_kernel(%arg0: i32, %arg1: memref<8x16xf32, #tpu.memory_space<vmem>>, %arg2: memref<16x32xf32, #tpu.memory_space<vmem>>, %arg3: memref<1x32xf32, #tpu.memory_space<vmem>>, %arg4: memref<32x8xf32, #tpu.memory_space<vmem>>, %arg5: memref<1x8xf32, #tpu.memory_space<vmem>>, %arg6: memref<8x8xf32, #tpu.memory_space<vmem>>) attributes {dimension_semantics = [#tpu.dimension_semantics<parallel>], iteration_bounds = array<i64: 1>, scalar_prefetch = 0 : i64, scratch_operands = 0 : i64, tpu.core_type = #tpu.core_type<tc>, window_params = [{transform_indices = @transform_0, window_bounds = array<i64: 8, 16>}, {pipeline_mode = #tpu.pipeline_mode<synchronous>, transform_indices = @transform_1, window_bounds = array<i64: 16, 32>}, {pipeline_mode = #tpu.pipeline_mode<synchronous>, transform_indices = @transform_2, window_bounds = array<i64: 1, 32>}, {pipeline_mode = #tpu.pipeline_mode<synchronous>, transform_indices = @transform_3, window_bounds = array<i64: 32, 8>}, {pipeline_mode = #tpu.pipeline_mode<synchronous>, transform_indices = @transform_4, window_bounds = array<i64: 1, 8>}, {transform_indices = @transform_5, window_bounds = array<i64: 8, 8>}]} {
    %c0 = arith.constant 0 : index
    %c0_0 = arith.constant 0 : index
    %0 = vector.load %arg1[%c0, %c0_0] : memref<8x16xf32, #tpu.memory_space<vmem>>, vector<8x16xf32>
    %c0_1 = arith.constant 0 : index
    %c0_2 = arith.constant 0 : index
    %1 = vector.load %arg2[%c0_1, %c0_2] : memref<16x32xf32, #tpu.memory_space<vmem>>, vector<16x32xf32>
    %cst = arith.constant dense<0.000000e+00> : vector<8x32xf32>
    %2 = tpu.matmul %0, %1, %cst {dimension_numbers = #tpu.dot_dimension_numbers<[1], [0], [0], [1], [0, 0, 1, 1], [], []>} : vector<8x16xf32>, vector<16x32xf32>, vector<8x32xf32> -> vector<8x32xf32>
    %c0_3 = arith.constant 0 : index
    %c0_4 = arith.constant 0 : index
    %3 = vector.load %arg3[%c0_3, %c0_4] : memref<1x32xf32, #tpu.memory_space<vmem>>, vector<1x32xf32>
    %4 = vector.broadcast %3 : vector<1x32xf32> to vector<8x32xf32>
    %5 = arith.addf %2, %4 : vector<8x32xf32>
    %cst_5 = arith.constant 0.000000e+00 : f32
    %6 = vector.broadcast %cst_5 : f32 to vector<8x32xf32>
    %7 = arith.maximumf %5, %6 : vector<8x32xf32>
    %c0_6 = arith.constant 0 : index
    %c0_7 = arith.constant 0 : index
    %8 = vector.load %arg4[%c0_6, %c0_7] : memref<32x8xf32, #tpu.memory_space<vmem>>, vector<32x8xf32>
    %cst_8 = arith.constant dense<0.000000e+00> : vector<8x8xf32>
    %9 = tpu.matmul %7, %8, %cst_8 {dimension_numbers = #tpu.dot_dimension_numbers<[1], [0], [0], [1], [0, 0, 1, 1], [], []>} : vector<8x32xf32>, vector<32x8xf32>, vector<8x8xf32> -> vector<8x8xf32>
    %c0_9 = arith.constant 0 : index
    %c0_10 = arith.constant 0 : index
    %10 = vector.load %arg5[%c0_9, %c0_10] : memref<1x8xf32, #tpu.memory_space<vmem>>, vector<1x8xf32>
    %11 = vector.broadcast %10 : vector<1x8xf32> to vector<8x8xf32>
    %12 = arith.addf %9, %11 : vector<8x8xf32>
    %13 = arith.negf %12 : vector<8x8xf32>
    %14 = math.exp %13 : vector<8x8xf32>
    %cst_11 = arith.constant 1.000000e+00 : f32
    %15 = vector.broadcast %cst_11 : f32 to vector<8x8xf32>
    %16 = arith.addf %15, %14 : vector<8x8xf32>
    %17 = arith.divf %15, %16 : vector<8x8xf32>
    %c0_12 = arith.constant 0 : index
    %c0_13 = arith.constant 0 : index
    %18 = vector.load %arg6[%c0_12, %c0_13] : memref<8x8xf32, #tpu.memory_space<vmem>>, vector<8x8xf32>
    tpu.vector_store %arg6[%c0_12, %c0_13], %17 {strides = array<i32>} : memref<8x8xf32, #tpu.memory_space<vmem>>, vector<8x8xf32>,
    return
  }
  func.func @transform_0(%arg0: i32) -> (i32, i32) {
    %c0_i32 = arith.constant 0 : i32
    %c0_i32_0 = arith.constant 0 : i32
    return %arg0, %c0_i32 : i32, i32
  }
  func.func @transform_1(%arg0: i32) -> (i32, i32) {
    %c0_i32 = arith.constant 0 : i32
    %c0_i32_0 = arith.constant 0 : i32
    %c0_i32_1 = arith.constant 0 : i32
    return %c0_i32, %c0_i32_0 : i32, i32
  }
  func.func @transform_2(%arg0: i32) -> (i32, i32) {
    %c0_i32 = arith.constant 0 : i32
    %c0_i32_0 = arith.constant 0 : i32
    %c0_i32_1 = arith.constant 0 : i32
    return %c0_i32, %c0_i32_0 : i32, i32
  }
  func.func @transform_3(%arg0: i32) -> (i32, i32) {
    %c0_i32 = arith.constant 0 : i32
    %c0_i32_0 = arith.constant 0 : i32
    %c0_i32_1 = arith.constant 0 : i32
    return %c0_i32, %c0_i32_0 : i32, i32
  }
  func.func @transform_4(%arg0: i32) -> (i32, i32) {
    %c0_i32 = arith.constant 0 : i32
    %c0_i32_0 = arith.constant 0 : i32
    %c0_i32_1 = arith.constant 0 : i32
    return %c0_i32, %c0_i32_0 : i32, i32
  }
  func.func @transform_5(%arg0: i32) -> (i32, i32) {
    %c0_i32 = arith.constant 0 : i32
    %c0_i32_0 = arith.constant 0 : i32
    return %arg0, %c0_i32 : i32, i32
  }
}

</mosaic_0001>

<llo_original>
// kernel: tpu_custom_call.1
$region0: #{tpu_custom_call.1}
  #allocation0 [shape = 'u32[]', space=smem, size = 0x4, offset = 0x4, fixed_abs, tag = 'smem constant byte address 0x4 - core index']
  #allocation1 [shape = 'u32[72,128]{1,0:T(1,128)}', space=vmem, size = 0x9000, scoped, tag = 'internal scratch']
  %s0 = inlined_call_operand.vmem [shape: f32[8,16], index: 0, kind: input, shape index: {}]
  %s1 = inlined_call_operand.vmem [shape: f32[16,32], index: 1, kind: input, shape index: {}]
  %s2 = inlined_call_operand.vmem [shape: f32[1,32], index: 2, kind: input, shape index: {}]
  %s3 = inlined_call_operand.vmem [shape: f32[32,8], index: 3, kind: input, shape index: {}]
  %s4 = inlined_call_operand.vmem [shape: f32[1,8], index: 4, kind: input, shape index: {}]
  %s5 = inlined_call_operand.hbm [shape: f32[8,8], index: 5, kind: output, shape index: {}]
  %s6 = sld [smem:[#allocation0]]
  $region30: #{tpu_custom_call.1} parent=0
    _
  %s8 = ssub.s32 1, %s6
  %s9 = scalar_select 0, %s8, %s6
  $region1: #{tpu_custom_call.1} parent=0
    #allocation2 [shape = 'u8[4096]{0}', space=vmem, size = 0x1000, scoped, tag = 'output window, operand 0, single buffered']
    #allocation3 [shape = 's32[1]{0}', space=sflag, size = 0x4, scoped, tag = 'scoped memory for tpu_custom_call.1']
    %10 = vsyncpa [#allocation3], 0
    // Predicated region
    $region2: #{tpu_custom_call.1} parent=1 // pred_check
      _
    $region3: #{tpu_custom_call.1} parent=1 // pred_check_branch
      %12 = sbr.rel (0) target = $region5
    $region4: #{tpu_custom_call.1} parent=1 // pred_region
      _
    $region5: #{tpu_custom_call.1} parent=1 // pred_fallthru
      _
    // Predicated region
    $region6: #{tpu_custom_call.1} parent=1 // pred_check
      _
    $region7: #{tpu_custom_call.1} parent=1 // pred_check_branch
      %14 = sbr.rel (0) target = $region9
    $region8: #{tpu_custom_call.1} parent=1 // pred_region
      _
    $region9: #{tpu_custom_call.1} parent=1 // pred_fallthru
      _
    // Predicated region
    $region10: #{tpu_custom_call.1} parent=1 // pred_check
      _
    $region11: #{tpu_custom_call.1} parent=1 // pred_check_branch
      %16 = sbr.rel (0) target = $region13
    $region12: #{tpu_custom_call.1} parent=1 // pred_region
      _
    $region13: #{tpu_custom_call.1} parent=1 // pred_fallthru
      _
    // Predicated region
    $region14: #{tpu_custom_call.1} parent=1 // pred_check
      _
    $region15: #{tpu_custom_call.1} parent=1 // pred_check_branch
      %18 = sbr.rel (0) target = $region17
    $region16: #{tpu_custom_call.1} parent=1 // pred_region
      _
    $region17: #{tpu_custom_call.1} parent=1 // pred_fallthru
      _
    // Predicated region
    $region18: #{tpu_custom_call.1} parent=1 // pred_check
      _
    $region19: #{tpu_custom_call.1} parent=1 // pred_check_branch
      %20 = sbr.rel (0) target = $region21
    $region20: #{tpu_custom_call.1} parent=1 // pred_region
      _
    $region21: #{tpu_custom_call.1} parent=1 // pred_fallthru
      _
    %v21 = vld [vmem:[%s0] sm:$0xff]
    %v22 = vld [vmem:[%s1] sm:$0xff]
    %v23 = vld [vmem:[%s1 + $0x8] sm:$0xff]
    %v24 = vld [vmem:[%s2] sm:$0x1]
    %v26 = vperm.slane %v24, 0
    %vm28 = vcmask 130048
    %v30 = vsel %vm28, %v21, 0
    %32 = vmatpush.msra.mxu0 0.0
    %33 = vmatpush.msra.mxu0 0.0
    %34 = vmatpush.msra.mxu0 0.0
    %35 = vmatpush.msra.mxu0 0.0
    %36 = vmatpush.msra.mxu0 0.0
    %37 = vmatpush.msra.mxu0 0.0
    %38 = vmatpush.msra.mxu0 0.0
    %39 = vmatpush.msra.mxu0 0.0
    %40 = vmatpush.msra.mxu0 0.0
    %41 = vmatpush.msra.mxu0 0.0
    %42 = vmatpush.msra.mxu0 0.0
    %43 = vmatpush.msra.mxu0 0.0
    %44 = vmatpush.msra.mxu0 0.0
    %45 = vmatpush.msra.mxu0 0.0
    %46 = vmatpush.msra.mxu0 %v23
    %47 = vmatpush.msra.mxu0 %v22
    %48 = vmatmul.f32.gmra.mxu0 %v30
    %v49 = vpop.f32.mrf.mxu0
    %v50 = vadd.f32 %v26, %v49
    %51 = vdwg.mxu0
    %v52 = vmax.f32 %v50, 0.0
    %v53 = vld [vmem:[%s3] sm:$0xff]
    %v54 = vld [vmem:[%s3 + $0x8] sm:$0xff]
    %v55 = vld [vmem:[%s3 + $0x10] sm:$0xff]
    %v56 = vld [vmem:[%s3 + $0x18] sm:$0xff]
    %v57 = vld [vmem:[%s4] sm:$0x1]
    %v59 = vperm.slane %v57, 0
    %vm61 = vcmask 261120
    %v63 = vsel %vm61, %v52, 0
    %65 = vmatpush.msra.mxu0 0.0
    %66 = vmatpush.msra.mxu0 0.0
    %67 = vmatpush.msra.mxu0 0.0
    %68 = vmatpush.msra.mxu0 0.0
    %69 = vmatpush.msra.mxu0 0.0
    %70 = vmatpush.msra.mxu0 0.0
    %71 = vmatpush.msra.mxu0 0.0
    %72 = vmatpush.msra.mxu0 0.0
    %73 = vmatpush.msra.mxu0 0.0
    %74 = vmatpush.msra.mxu0 0.0
    %75 = vmatpush.msra.mxu0 0.0
    %76 = vmatpush.msra.mxu0 0.0
    %77 = vmatpush.msra.mxu0 %v56
    %78 = vmatpush.msra.mxu0 %v55
    %79 = vmatpush.msra.mxu0 %v54
    %80 = vmatpush.msra.mxu0 %v53
    %81 = vmatmul.f32.gmra.mxu0 %v63
    %v82 = vpop.f32.mrf.mxu0
    %v83 = vadd.f32 %v59, %v82
    %84 = vdwg.mxu0
    %v85 = vxor.u32 %v83, 2147483648
    %v86 = vmul.f32 %v85, 1.442695
    %v87 = vpow.pop %v86
    %v88 = vadd.f32 %v87, 1.0
    %v89 = vrcp.pop %v88
    %v90 = vmul.f32 %v88, %v89
    %v91 = vsub.f32 1.0, %v90
    %v92 = vmul.f32 %v89, %v91
    %v93 = vadd.f32 %v89, %v92
    %vm94 = vweird.f32 %v88
    %vm95 = vweird.f32 %v89
    %vm96 = vmor %vm94, %vm95
    %v97 = vsel %vm96, %v89, %v93
    %v98 = vand.u32 2147483647, %v88
    %vm99 = vcmp.eq.f32.partialorder %v98, 8.507059e+37
    %v100 = vand.u32 %v88, 2147483648
    %v101 = vor.u32 1.1754944e-38, %v100
    %v102 = vsel %vm99, %v101, %v97
    %v103 = vmul.f32 1.0, %v102
    %vm104 = vcmask 64512
    %105 = vst.msk [vmem:[#allocation2] sm:$0xff] %vm104, %v103
    // Predicated region
    $region22: #{tpu_custom_call.1} parent=1 // pred_check
      _
    $region23: #{tpu_custom_call.1} parent=1 // pred_check_branch
      %107 = sbr.rel (0) target = $region25
    $region24: #{tpu_custom_call.1} parent=1 // pred_region
      %109 = vsyncadd [#allocation3], 0
      %s111 = sshll.u32 [#allocation2], 4
      %s112 = int_to_ptr.vmem [resolvable:$true] %s111
      %s113 = sshll.u32 %s5, 4
      %s114 = int_to_ptr.hbm [resolvable:$true] %s113
      %116 = dma.vmem_to_hbm [thread:$0]  %s112, 128, %s114, [#allocation3]
    $region25: #{tpu_custom_call.1} parent=1 // pred_fallthru
      _
    // Predicated region
    $region26: #{tpu_custom_call.1} parent=1 // pred_check
      _
    $region27: #{tpu_custom_call.1} parent=1 // pred_check_branch
      %118 = sbr.rel (0) target = $region29
    $region28: #{tpu_custom_call.1} parent=1 // pred_region
      %120 = dma.done [#allocation3], 128
    $region29: #{tpu_custom_call.1} parent=1 // pred_fallthru
      _
    %121 = vsyncpa [#allocation3], 1

</llo_original>
